<compile_context>
chip_gen: v6e
topology: v6e:2x2x1
jax: 0.10.0
libtpu: 0.0.40
codegen_flags: <defaults>
</compile_context>

<pallas_src>
import functools

import jax
import jax.numpy as jnp
from jax.experimental import pallas as pl
from jax.experimental.pallas import tpu as pltpu


# ------------------------------------------------------------------
# Generation-aware VMEM budget
# ------------------------------------------------------------------

def _vmem_budget_bytes():
    """~75% of this generation's physical VMEM (v5e/v6e: 128 MiB, v7x: 64 MiB per TC)."""
    try:
        cap = int(pltpu.get_tpu_info().vmem_capacity_bytes)
    except Exception:
        cap = 64 * 2 ** 20  # conservative fallback (v7x per-TC)
    return (cap * 3) // 4


# ------------------------------------------------------------------
# Fused arcface projection + fcd loss kernel (single stacked matmul, K-tiled)
# ------------------------------------------------------------------

def _arcface_fcd_kernel(x_ref, w_ref, o_ref, acc_ref, *, n_rows):
    k = pl.program_id(0)

    @pl.when(k == 0)
    def _init():
        acc_ref[...] = jnp.zeros_like(acc_ref)

    # One bf16 MXU dot per K step: rows [0:n_rows] are raw, [n_rows:2*n_rows] are pred.
    acc_ref[...] += jnp.dot(x_ref[...], w_ref[...], preferred_element_type=jnp.float32)

    @pl.when(k == pl.num_programs(0) - 1)
    def _finalize():
        feat = acc_ref.shape[-1]
        logits = acc_ref[...]

        def _normalize(v):
            # torch.std default is unbiased (ddof=1); eps added to std like the reference.
            m = jnp.mean(v, axis=-1, keepdims=True)
            s = jnp.sqrt(jnp.sum((v - m) ** 2, axis=-1, keepdims=True) / (feat - 1))
            return (v - m) / (1e-7 + s)  # exact divide: finalize runs once

        ln = _normalize(logits)                      # per-row normalize (raw & pred rows)
        diff = ln[n_rows:] - ln[:n_rows]             # pred_norm - raw_norm
        o_ref[...] = jnp.full((1, 1), jnp.mean(diff * diff), jnp.float32)


def _arcface_fcd_loss(raw_flat, pred_flat, w, vmem_cap):
    n, d = raw_flat.shape
    feat = w.shape[1]
    n2 = 2 * n

    if w.dtype != jnp.bfloat16:
        # TODO(synk): in production keep arcface W persistently in bf16 (cast once, not per call).
        w = w.astype(jnp.bfloat16)

    # Stack raw + pred so the (tk, feat) W tile is streamed through the MXU only once per
    # K step and a single accumulator is read-modify-written.
    x = jnp.concatenate(
        [raw_flat.astype(jnp.bfloat16), pred_flat.astype(jnp.bfloat16)], axis=0
    )

    # K-tile selection: whole-D single step when it fits the VMEM budget; otherwise the
    # largest 128-multiple divisor of D (pad only as a last resort).
    acc_bytes = n2 * feat * 4
    per_tk = 2 * 2 * (n2 + feat)            # double-buffered bf16 x/w blocks, per K element
    budget = int(vmem_cap * 0.6)
    tk_cap = max(128, (budget - acc_bytes) // per_tk)

    if d <= tk_cap:
        tk, d_pad = d, d
    else:
        tk = 0
        t = (tk_cap // 128) * 128
        while t >= 128:
            if d % t == 0:
                tk = t
                break
            t -= 128
        if tk:
            d_pad = d
        else:
            # TODO(synk): per-call padding of W is wasteful; pre-pad W once outside the loss.
            tk = max(128, (tk_cap // 128) * 128)
            d_pad = int(pl.cdiv(d, tk)) * tk
            x = jnp.pad(x, ((0, 0), (0, d_pad - d)))
            w = jnp.pad(w, ((0, d_pad - d), (0, 0)))

    k_tiles = d_pad // tk
    est = 2 * (n2 * tk * 2 + tk * feat * 2) + acc_bytes
    vmem_limit = int(min(vmem_cap, max(4 * est, 32 * 2 ** 20)))

    kernel = functools.partial(_arcface_fcd_kernel, n_rows=n)
    out = pl.pallas_call(
        kernel,
        out_shape=jax.ShapeDtypeStruct((1, 1), jnp.float32),
        grid_spec=pltpu.PrefetchScalarGridSpec(
            num_scalar_prefetch=0,
            grid=(k_tiles,),
            in_specs=[
                pl.BlockSpec((n2, tk), lambda k: (0, k)),
                pl.BlockSpec((tk, feat), lambda k: (k, 0)),
            ],
            out_specs=pl.BlockSpec((1, 1), lambda k: (0, 0)),
            scratch_shapes=[pltpu.VMEM((n2, feat), jnp.float32)],
        ),
        compiler_params=pltpu.CompilerParams(
            dimension_semantics=("arbitrary",),  # K is a reduction axis
            vmem_limit_bytes=vmem_limit,
        ),
    )(x, w)
    return out[0, 0]


# ------------------------------------------------------------------
# Masked normalized pixel loss kernel (row-tiled, parallel, partial outputs)
# ------------------------------------------------------------------

def _pixel_loss_kernel(imgs_ref, pred_ref, mask_ref, o_ref):
    x = imgs_ref[...].astype(jnp.float32)   # (R, HW) fully sublane-packed rows
    p = pred_ref[...].astype(jnp.float32)
    m = mask_ref[...].astype(jnp.float32)
    hw = x.shape[-1]

    # norm_pix_loss: per-(n, c) mean and unbiased var over spatial dims (one row = one (n, c)).
    mean = jnp.mean(x, axis=-1, keepdims=True)
    var = jnp.sum((x - mean) ** 2, axis=-1, keepdims=True) / (hw - 1)
    xn = (x - mean) * jax.lax.rsqrt(var + 1e-6)     # rsqrt -> EUP slot

    num = jnp.sum((p - xn) ** 2 * m)
    o_ref[...] = jnp.full((1, 1, 1), num, jnp.float32)   # per-tile partial numerator


def _pick_rows_tile(rows, hw, vmem_cap):
    budget = int(vmem_cap * 0.5)
    # 3 double-buffered input streams + ~4 f32 temporaries per row.
    per_row = 3 * hw * 4 * 2 + 4 * hw * 4
    r_cap = max(8, budget // max(per_row, 1))
    if rows <= r_cap:
        return rows, rows
    r = max(8, (min(r_cap, rows) // 8) * 8)
    rows_pad = int(pl.cdiv(rows, r)) * r
    return r, rows_pad


def _compute_pixel_loss(imgs, pred, mask, vmem_cap):
    n, c, hgt, wdt = imgs.shape
    L = mask.shape[1]
    h = int(L ** 0.5)
    w = L // h
    # TODO(synk): square token grid assumed (h = int(sqrt(L))), same silent assumption as the reference.

    m = mask.reshape(n, 1, h, w).astype(jnp.float32)
    if hgt % h == 0 and wdt % w == 0:
        # nearest upsample == block repeat: reshape + broadcast, no gathers.
        sh, sw = hgt // h, wdt // w
        m_up = jnp.broadcast_to(
            m[:, :, :, None, :, None], (n, 1, h, sh, w, sw)
        ).reshape(n, 1, hgt, wdt)
    else:
        # general nearest: floor(dst * in/out), matches F.interpolate(mode='nearest')
        ri = (jnp.arange(hgt) * h) // hgt
        ci = (jnp.arange(wdt) * w) // wdt
        m_up = m[:, :, ri, :][:, :, :, ci]

    hw = hgt * wdt
    rows = n * c
    imgs2 = imgs.reshape(rows, hw)
    pred2 = pred.reshape(rows, hw)
    # Expand mask across channels so kernel rows are fully sublane-packed (R, HW) tiles.
    mask2 = jnp.broadcast_to(m_up, (n, c, hgt, wdt)).reshape(rows, hw).astype(imgs2.dtype)

    # Analytic denominator (no per-step in-kernel mask reduction).
    den = jnp.sum(m_up)

    r_tile, rows_pad = _pick_rows_tile(rows, hw, vmem_cap)
    if rows_pad != rows:
        padcfg = ((0, rows_pad - rows), (0, 0))
        imgs2 = jnp.pad(imgs2, padcfg)      # zero rows: xn=0, pred=0, mask=0 -> contribute 0
        pred2 = jnp.pad(pred2, padcfg)
        mask2 = jnp.pad(mask2, padcfg)
    n_tiles = rows_pad // r_tile

    itemsize = jnp.dtype(imgs2.dtype).itemsize
    blk = 3 * r_tile * hw * itemsize * 2 + 4 * r_tile * hw * 4
    vmem_limit = int(min(vmem_cap, max(4 * blk, 32 * 2 ** 20)))

    partial = pl.pallas_call(
        _pixel_loss_kernel,
        out_shape=jax.ShapeDtypeStruct((n_tiles, 1, 1), jnp.float32),
        grid_spec=pltpu.PrefetchScalarGridSpec(
            num_scalar_prefetch=0,
            grid=(n_tiles,),
            in_specs=[
                pl.BlockSpec((r_tile, hw), lambda i: (i, 0)),
                pl.BlockSpec((r_tile, hw), lambda i: (i, 0)),
                pl.BlockSpec((r_tile, hw), lambda i: (i, 0)),
            ],
            out_specs=pl.BlockSpec((1, 1, 1), lambda i: (i, 0, 0)),
        ),
        compiler_params=pltpu.CompilerParams(
            # each step writes its own partial output -> parallel (2nd TC usable on v7x)
            dimension_semantics=("parallel",),
            vmem_limit_bytes=vmem_limit,
        ),
    )(imgs2, pred2, mask2)

    num = jnp.sum(partial)
    return num / den / 3.0


# ------------------------------------------------------------------
# PretrainLoss.forward equivalent
# ------------------------------------------------------------------

def pretrain_loss_forward(raw_img, pred_img, mask, arcface_w,
                          face_loss=True, weight_dict=None):
    if weight_dict is None:
        weight_dict = {'arcface': 1, 'gan': 1, 'pixel': 1}

    vmem_cap = _vmem_budget_bytes()
    n = raw_img.shape[0]

    arcface_loss = jnp.zeros((), jnp.float32)
    if face_loss:
        # raw path runs under torch.no_grad -> stop_gradient here; cast straight to bf16.
        raw_flat = jax.lax.stop_gradient(raw_img).reshape(n, -1)
        pred_flat = pred_img.reshape(n, -1)
        arcface_loss = _arcface_fcd_loss(raw_flat, pred_flat, arcface_w, vmem_cap)

    pixel_loss = _compute_pixel_loss(raw_img, pred_img, mask, vmem_cap)
    return (weight_dict['arcface'] * arcface_loss,
            weight_dict['pixel'] * pixel_loss)


# ------------------------------------------------------------------
# main
# ------------------------------------------------------------------

if __name__ == "__main__":
    key = jax.random.PRNGKey(0)
    k1, k2, k3, k4 = jax.random.split(key, 4)

    N, C, H, W = 2, 3, 16, 16      # small image, 3 channels (loss hard-codes /3)
    h = w = 4                      # mask token grid (L = 16, square)
    L = h * w
    FEAT = 512                     # arcface embedding dim

    raw_img = jax.random.normal(k1, (N, C, H, W), jnp.float32)
    pred_img = raw_img + 0.1 * jax.random.normal(k2, (N, C, H, W), jnp.float32)
    mask = (jax.random.uniform(k3, (N, L)) > 0.5).astype(jnp.float32)
    mask = mask.at[:, 0].set(1.0)  # guarantee non-empty mask

    # deterministic synthetic "arcface" projection weights, cast to bf16 ONCE here
    # (persistent bf16 weights -> no per-call cast/pad passes over W).
    arcface_w = (0.02 * jax.random.normal(k4, (C * H * W, FEAT), jnp.float32)).astype(jnp.bfloat16)

    arc_l, pix_l = pretrain_loss_forward(raw_img, pred_img, mask, arcface_w)
    jax.block_until_ready((arc_l, pix_l))
    print("KERNEL_OK")
</pallas_src>

<mosaic_0001>
module attributes {stable_mosaic.version = 11 : i64} {
  func.func @_arcface_fcd_kernel(%arg0: i32, %arg1: memref<4x768xbf16, #tpu.memory_space<vmem>>, %arg2: memref<768x512xbf16, #tpu.memory_space<vmem>>, %arg3: memref<1x1xf32, #tpu.memory_space<vmem>>, %arg4: memref<4x512xf32, #tpu.memory_space<vmem>>) attributes {dimension_semantics = [#tpu.dimension_semantics<arbitrary>], iteration_bounds = array<i64: 1>, scalar_prefetch = 0 : i64, scratch_operands = 1 : i64, tpu.core_type = #tpu.core_type<tc>, window_params = [{transform_indices = @transform_0, window_bounds = array<i64: 4, 768>}, {transform_indices = @transform_1, window_bounds = array<i64: 768, 512>}, {pipeline_mode = #tpu.pipeline_mode<synchronous>, transform_indices = @transform_2, window_bounds = array<i64: 1, 1>}]} {
    %c0_i32 = arith.constant 0 : i32
    %0 = arith.cmpi eq, %arg0, %c0_i32 : i32
    %1 = arith.extui %0 : i1 to i32
    %c0_i32_0 = arith.constant 0 : i32
    %2 = arith.cmpi ne, %1, %c0_i32_0 : i32
    scf.if %2 {
      %cst_10 = arith.constant 0.000000e+00 : f32
      %12 = vector.broadcast %cst_10 : f32 to vector<4x512xf32>
      %c0_11 = arith.constant 0 : index
      %c0_12 = arith.constant 0 : index
      %13 = vector.load %arg4[%c0_11, %c0_12] : memref<4x512xf32, #tpu.memory_space<vmem>>, vector<4x512xf32>
      tpu.vector_store %arg4[%c0_11, %c0_12], %12 {strides = array<i32>} : memref<4x512xf32, #tpu.memory_space<vmem>>, vector<4x512xf32>,
    } else {
    }
    %c0 = arith.constant 0 : index
    %c0_1 = arith.constant 0 : index
    %3 = vector.load %arg4[%c0, %c0_1] : memref<4x512xf32, #tpu.memory_space<vmem>>, vector<4x512xf32>
    %c0_2 = arith.constant 0 : index
    %c0_3 = arith.constant 0 : index
    %4 = vector.load %arg1[%c0_2, %c0_3] : memref<4x768xbf16, #tpu.memory_space<vmem>>, vector<4x768xbf16>
    %c0_4 = arith.constant 0 : index
    %c0_5 = arith.constant 0 : index
    %5 = vector.load %arg2[%c0_4, %c0_5] : memref<768x512xbf16, #tpu.memory_space<vmem>>, vector<768x512xbf16>
    %cst = arith.constant dense<0.000000e+00> : vector<4x512xf32>
    %6 = tpu.matmul %4, %5, %cst {dimension_numbers = #tpu.dot_dimension_numbers<[1], [0], [0], [1], [0, 0, 1, 1], [], []>} : vector<4x768xbf16>, vector<768x512xbf16>, vector<4x512xf32> -> vector<4x512xf32>
    %7 = arith.addf %3, %6 : vector<4x512xf32>
    %c0_6 = arith.constant 0 : index
    %c0_7 = arith.constant 0 : index
    %8 = vector.load %arg4[%c0_6, %c0_7] : memref<4x512xf32, #tpu.memory_space<vmem>>, vector<4x512xf32>
    tpu.vector_store %arg4[%c0_6, %c0_7], %7 {strides = array<i32>} : memref<4x512xf32, #tpu.memory_space<vmem>>, vector<4x512xf32>,
    %c0_i32_8 = arith.constant 0 : i32
    %9 = arith.cmpi eq, %arg0, %c0_i32_8 : i32
    %10 = arith.extui %9 : i1 to i32
    %c0_i32_9 = arith.constant 0 : i32
    %11 = arith.cmpi ne, %10, %c0_i32_9 : i32
    scf.if %11 {
      %c0_10 = arith.constant 0 : index
      %c0_11 = arith.constant 0 : index
      %12 = vector.load %arg4[%c0_10, %c0_11] : memref<4x512xf32, #tpu.memory_space<vmem>>, vector<4x512xf32>
      %cst_12 = arith.constant dense<0.000000e+00> : vector<4xf32>
      %13 = vector.multi_reduction <add>, %12, %cst_12 [1] : vector<4x512xf32> to vector<4xf32>
      %14 = vector.shape_cast %13 : vector<4xf32> to vector<4x1xf32>
      %cst_13 = arith.constant 5.120000e+02 : f32
      %15 = vector.broadcast %cst_13 : f32 to vector<4x1xf32>
      %16 = arith.divf %14, %15 : vector<4x1xf32>
      %17 = vector.broadcast %16 : vector<4x1xf32> to vector<4x512xf32>
      %18 = arith.subf %12, %17 : vector<4x512xf32>
      %19 = arith.mulf %18, %18 : vector<4x512xf32>
      %cst_14 = arith.constant dense<0.000000e+00> : vector<4xf32>
      %20 = vector.multi_reduction <add>, %19, %cst_14 [1] : vector<4x512xf32> to vector<4xf32>
      %21 = vector.shape_cast %20 : vector<4xf32> to vector<4x1xf32>
      %cst_15 = arith.constant 5.110000e+02 : f32
      %22 = vector.broadcast %cst_15 : f32 to vector<4x1xf32>
      %23 = arith.divf %21, %22 : vector<4x1xf32>
      %24 = math.sqrt %23 : vector<4x1xf32>
      %25 = vector.broadcast %16 : vector<4x1xf32> to vector<4x512xf32>
      %26 = arith.subf %12, %25 : vector<4x512xf32>
      %cst_16 = arith.constant 1.000000e-07 : f32
      %27 = vector.broadcast %cst_16 : f32 to vector<4x1xf32>
      %28 = arith.addf %27, %24 : vector<4x1xf32>
      %29 = vector.broadcast %28 : vector<4x1xf32> to vector<4x512xf32>
      %30 = arith.divf %26, %29 : vector<4x512xf32>
      %31 = vector.extract_strided_slice %30 {offsets = [2, 0], sizes = [2, 512], strides = [1, 1]} : vector<4x512xf32> to vector<2x512xf32>
      %32 = vector.extract_strided_slice %30 {offsets = [0, 0], sizes = [2, 512], strides = [1, 1]} : vector<4x512xf32> to vector<2x512xf32>
      %33 = arith.subf %31, %32 : vector<2x512xf32>
      %34 = arith.mulf %33, %33 : vector<2x512xf32>
      %35 = vector.shape_cast %34 : vector<2x512xf32> to vector<1x2x512xf32>
      %cst_17 = arith.constant dense<0.000000e+00> : vector<1xf32>
      %36 = vector.multi_reduction <add>, %35, %cst_17 [1, 2] : vector<1x2x512xf32> to vector<1xf32>
      %37 = vector.shape_cast %36 : vector<1xf32> to vector<1x1x1xf32>
      %38 = vector.extract %37[0, 0, 0] : f32 from vector<1x1x1xf32>
      %cst_18 = arith.constant 1.024000e+03 : f32
      %39 = arith.divf %38, %cst_18 : f32
      %40 = vector.broadcast %39 : f32 to vector<1x1xf32>
      %c0_19 = arith.constant 0 : index
      %c0_20 = arith.constant 0 : index
      %41 = vector.load %arg3[%c0_19, %c0_20] : memref<1x1xf32, #tpu.memory_space<vmem>>, vector<1x1xf32>
      tpu.vector_store %arg3[%c0_19, %c0_20], %40 {strides = array<i32>} : memref<1x1xf32, #tpu.memory_space<vmem>>, vector<1x1xf32>,
    } else {
    }
    return
  }
  func.func @transform_0(%arg0: i32) -> (i32, i32) {
    %c0_i32 = arith.constant 0 : i32
    %c0_i32_0 = arith.constant 0 : i32
    return %c0_i32, %arg0 : i32, i32
  }
  func.func @transform_1(%arg0: i32) -> (i32, i32) {
    %c0_i32 = arith.constant 0 : i32
    %c0_i32_0 = arith.constant 0 : i32
    return %arg0, %c0_i32 : i32, i32
  }
  func.func @transform_2(%arg0: i32) -> (i32, i32) {
    %c0_i32 = arith.constant 0 : i32
    %c0_i32_0 = arith.constant 0 : i32
    %c0_i32_1 = arith.constant 0 : i32
    return %c0_i32, %c0_i32_0 : i32, i32
  }
}

</mosaic_0001>

<llo_original>
// kernel: tpu_custom_call.1
$region0: #{tpu_custom_call.1}
  #allocation0 [shape = 'u32[]', space=smem, size = 0x4, offset = 0x4, fixed_abs, tag = 'smem constant byte address 0x4 - core index']
  #allocation1 [shape = 'u32[144,128]{1,0:T(1,128)}', space=vmem, size = 0x12000, scoped, tag = 'internal scratch']
  #allocation2 [shape = 'f32[4,512]{1,0:T(4,128)}', space=vmem, size = 0x2000, scoped, tag = 'scratch operand']
  %s0 = inlined_call_operand.hbm [shape: bf16[4,768], index: 0, kind: input, shape index: {}]
  %s1 = inlined_call_operand.hbm [shape: bf16[768,512], index: 1, kind: input, shape index: {}]
  %s2 = inlined_call_operand.hbm [shape: f32[1,1], index: 2, kind: output, shape index: {}]
  %s3 = sld [smem:[#allocation0]]
  $region34: #{tpu_custom_call.1} parent=0
    _
  %s5 = ssub.s32 1, %s3
  %s6 = scalar_select 0, %s5, %s3
  $region1: #{tpu_custom_call.1} parent=0
    #allocation3 [shape = 'u8[6144]{0}', space=vmem, size = 0x1800, scoped, tag = 'input window, operand 0, single buffered']
    #allocation4 [shape = 's32[1]{0}', space=sflag, size = 0x4, scoped, tag = 'scoped memory for tpu_custom_call.1']
    #allocation5 [shape = 's32[1]{0}', space=sflag, size = 0x4, scoped, tag = 'scoped memory for tpu_custom_call.1']
    #allocation6 [shape = 'u8[786432]{0}', space=vmem, size = 0xc0000, scoped, tag = 'input window, operand 1, single buffered']
    #allocation7 [shape = 's32[1]{0}', space=sflag, size = 0x4, scoped, tag = 'scoped memory for tpu_custom_call.1']
    #allocation8 [shape = 'u8[512]{0}', space=vmem, size = 0x400, scoped, tag = 'output window, operand 0, single buffered']
    %7 = vsyncpa [#allocation4], 0
    %8 = vsyncpa [#allocation7], 0
    %9 = vsyncpa [#allocation5], 0
    // Predicated region
    $region2: #{tpu_custom_call.1} parent=1 // pred_check
      _
    $region3: #{tpu_custom_call.1} parent=1 // pred_check_branch
      %11 = sbr.rel (0) target = $region5
    $region4: #{tpu_custom_call.1} parent=1 // pred_region
      %s13 = ssub.s32 192, 192
      %14 = vsyncadd [#allocation4], %s13
      %s16 = sshll.u32 [#allocation3], 4
      %s17 = int_to_ptr.vmem [resolvable:$true] %s16
      %19 = dma.hbm_to_vmem [thread:$0]  %s0, 192, %s17, [#allocation4]
    $region5: #{tpu_custom_call.1} parent=1 // pred_fallthru
      _
    // Predicated region
    $region6: #{tpu_custom_call.1} parent=1 // pred_check
      _
    $region7: #{tpu_custom_call.1} parent=1 // pred_check_branch
      %21 = sbr.rel (0) target = $region9
    $region8: #{tpu_custom_call.1} parent=1 // pred_region
      %s23 = ssub.s32 24576, 24576
      %24 = vsyncadd [#allocation7], %s23
      %s25 = sshll.u32 [#allocation6], 4
      %s26 = int_to_ptr.vmem [resolvable:$true] %s25
      %31 = dma.hbm_to_vmem [thread:$0]  %s1, 24576, %s26, [#allocation7], 256, 256, 16
    $region9: #{tpu_custom_call.1} parent=1 // pred_fallthru
      _
    // Predicated region
    $region10: #{tpu_custom_call.1} parent=1 // pred_check
      _
    $region11: #{tpu_custom_call.1} parent=1 // pred_check_branch
      %33 = sbr.rel (0) target = $region13
    $region12: #{tpu_custom_call.1} parent=1 // pred_region
      %34 = dma.done [#allocation4], 192
    $region13: #{tpu_custom_call.1} parent=1 // pred_fallthru
      _
    // Predicated region
    $region14: #{tpu_custom_call.1} parent=1 // pred_check
      _
    $region15: #{tpu_custom_call.1} parent=1 // pred_check_branch
      %36 = sbr.rel (0) target = $region17
    $region16: #{tpu_custom_call.1} parent=1 // pred_region
      %37 = dma.done [#allocation7], 24576
    $region17: #{tpu_custom_call.1} parent=1 // pred_fallthru
      _
    %p38 = scmp.eq.s32.totalorder 0, 0
    // Predicated region
    $region18: #{tpu_custom_call.1} parent=1 // pred_check
      %p39 = pneg %p38
    $region19: #{tpu_custom_call.1} parent=1 // pred_check_branch
      %41 = sbr.rel (%p39) target = $region21
    $region20: #{tpu_custom_call.1} parent=1 // pred_region
      %42 = vst [vmem:[#allocation2] sm:$0xff] 0.0
      %43 = vst [vmem:[#allocation2 + $0x8] sm:$0xff] 0.0
    $region21: #{tpu_custom_call.1} parent=1 // pred_fallthru
      _
    %v44 = vld [vmem:[#allocation2] sm:$0xff]
    %v45 = vld [vmem:[#allocation2 + $0x8] sm:$0xff]
    %v46 = vld [vmem:[#allocation3] sm:$0xff]
    %v47 = vld [vmem:[#allocation3 + $0x8] sm:$0xf]
    %v48 = vld [vmem:[#allocation6] sm:$0xff]
    %v49 = vld [vmem:[#allocation6 + $0x8] sm:$0xff]
    %v50 = vld [vmem:[#allocation6 + $0x10] sm:$0xff]
    %v51 = vld [vmem:[#allocation6 + $0x18] sm:$0xff]
    %v52 = vld [vmem:[#allocation6 + $0x20] sm:$0xff]
    %v53 = vld [vmem:[#allocation6 + $0x28] sm:$0xff]
    %v54 = vld [vmem:[#allocation6 + $0x30] sm:$0xff]
    %v55 = vld [vmem:[#allocation6 + $0x38] sm:$0xff]
    %v56 = vld [vmem:[#allocation6 + $0x40] sm:$0xff]
    %v57 = vld [vmem:[#allocation6 + $0x48] sm:$0xff]
    %v58 = vld [vmem:[#allocation6 + $0x50] sm:$0xff]
    %v59 = vld [vmem:[#allocation6 + $0x58] sm:$0xff]
    %v60 = vld [vmem:[#allocation6 + $0x60] sm:$0xff]
    %v61 = vld [vmem:[#allocation6 + $0x68] sm:$0xff]
    %v62 = vld [vmem:[#allocation6 + $0x70] sm:$0xff]
    %v63 = vld [vmem:[#allocation6 + $0x78] sm:$0xff]
    %v64 = vld [vmem:[#allocation6 + $0x80] sm:$0xff]
    %v65 = vld [vmem:[#allocation6 + $0x88] sm:$0xff]
    %v66 = vld [vmem:[#allocation6 + $0x90] sm:$0xff]
    %v67 = vld [vmem:[#allocation6 + $0x98] sm:$0xff]
    %v68 = vld [vmem:[#allocation6 + $0xa0] sm:$0xff]
    %v69 = vld [vmem:[#allocation6 + $0xa8] sm:$0xff]
    %v70 = vld [vmem:[#allocation6 + $0xb0] sm:$0xff]
    %v71 = vld [vmem:[#allocation6 + $0xb8] sm:$0xff]
    %v72 = vld [vmem:[#allocation6 + $0xc0] sm:$0xff]
    %v73 = vld [vmem:[#allocation6 + $0xc8] sm:$0xff]
    %v74 = vld [vmem:[#allocation6 + $0xd0] sm:$0xff]
    %v75 = vld [vmem:[#allocation6 + $0xd8] sm:$0xff]
    %v76 = vld [vmem:[#allocation6 + $0xe0] sm:$0xff]
    %v77 = vld [vmem:[#allocation6 + $0xe8] sm:$0xff]
    %v78 = vld [vmem:[#allocation6 + $0xf0] sm:$0xff]
    %v79 = vld [vmem:[#allocation6 + $0xf8] sm:$0xff]
    %v80 = vld [vmem:[#allocation6 + $0x100] sm:$0xff]
    %v81 = vld [vmem:[#allocation6 + $0x108] sm:$0xff]
    %v82 = vld [vmem:[#allocation6 + $0x110] sm:$0xff]
    %v83 = vld [vmem:[#allocation6 + $0x118] sm:$0xff]
    %v84 = vld [vmem:[#allocation6 + $0x120] sm:$0xff]
    %v85 = vld [vmem:[#allocation6 + $0x128] sm:$0xff]
    %v86 = vld [vmem:[#allocation6 + $0x130] sm:$0xff]
    %v87 = vld [vmem:[#allocation6 + $0x138] sm:$0xff]
    %v88 = vld [vmem:[#allocation6 + $0x140] sm:$0xff]
    %v89 = vld [vmem:[#allocation6 + $0x148] sm:$0xff]
    %v90 = vld [vmem:[#allocation6 + $0x150] sm:$0xff]
    %v91 = vld [vmem:[#allocation6 + $0x158] sm:$0xff]
    %v92 = vld [vmem:[#allocation6 + $0x160] sm:$0xff]
    %v93 = vld [vmem:[#allocation6 + $0x168] sm:$0xff]
    %v94 = vld [vmem:[#allocation6 + $0x170] sm:$0xff]
    %v95 = vld [vmem:[#allocation6 + $0x178] sm:$0xff]
    %v96 = vld [vmem:[#allocation6 + $0x180] sm:$0xff]
    %v97 = vld [vmem:[#allocation6 + $0x188] sm:$0xff]
    %v98 = vld [vmem:[#allocation6 + $0x190] sm:$0xff]
    %v99 = vld [vmem:[#allocation6 + $0x198] sm:$0xff]
    %v100 = vld [vmem:[#allocation6 + $0x1a0] sm:$0xff]
    %v101 = vld [vmem:[#allocation6 + $0x1a8] sm:$0xff]
    %v102 = vld [vmem:[#allocation6 + $0x1b0] sm:$0xff]
    %v103 = vld [vmem:[#allocation6 + $0x1b8] sm:$0xff]
    %v104 = vld [vmem:[#allocation6 + $0x1c0] sm:$0xff]
    %v105 = vld [vmem:[#allocation6 + $0x1c8] sm:$0xff]
    %v106 = vld [vmem:[#allocation6 + $0x1d0] sm:$0xff]
    %v107 = vld [vmem:[#allocation6 + $0x1d8] sm:$0xff]
    %v108 = vld [vmem:[#allocation6 + $0x1e0] sm:$0xff]
    %v109 = vld [vmem:[#allocation6 + $0x1e8] sm:$0xff]
    %v110 = vld [vmem:[#allocation6 + $0x1f0] sm:$0xff]
    %v111 = vld [vmem:[#allocation6 + $0x1f8] sm:$0xff]
    %v112 = vld [vmem:[#allocation6 + $0x200] sm:$0xff]
    %v113 = vld [vmem:[#allocation6 + $0x208] sm:$0xff]
    %v114 = vld [vmem:[#allocation6 + $0x210] sm:$0xff]
    %v115 = vld [vmem:[#allocation6 + $0x218] sm:$0xff]
    %v116 = vld [vmem:[#allocation6 + $0x220] sm:$0xff]
    %v117 = vld [vmem:[#allocation6 + $0x228] sm:$0xff]
    %v118 = vld [vmem:[#allocation6 + $0x230] sm:$0xff]
    %v119 = vld [vmem:[#allocation6 + $0x238] sm:$0xff]
    %v120 = vld [vmem:[#allocation6 + $0x240] sm:$0xff]
    %v121 = vld [vmem:[#allocation6 + $0x248] sm:$0xff]
    %v122 = vld [vmem:[#allocation6 + $0x250] sm:$0xff]
    %v123 = vld [vmem:[#allocation6 + $0x258] sm:$0xff]
    %v124 = vld [vmem:[#allocation6 + $0x260] sm:$0xff]
    %v125 = vld [vmem:[#allocation6 + $0x268] sm:$0xff]
    %v126 = vld [vmem:[#allocation6 + $0x270] sm:$0xff]
    %v127 = vld [vmem:[#allocation6 + $0x278] sm:$0xff]
    %v128 = vld [vmem:[#allocation6 + $0x280] sm:$0xff]
    %v129 = vld [vmem:[#allocation6 + $0x288] sm:$0xff]
    %v130 = vld [vmem:[#allocation6 + $0x290] sm:$0xff]
    %v131 = vld [vmem:[#allocation6 + $0x298] sm:$0xff]
    %v132 = vld [vmem:[#allocation6 + $0x2a0] sm:$0xff]
    %v133 = vld [vmem:[#allocation6 + $0x2a8] sm:$0xff]
    %v134 = vld [vmem:[#allocation6 + $0x2b0] sm:$0xff]
    %v135 = vld [vmem:[#allocation6 + $0x2b8] sm:$0xff]
    %v136 = vld [vmem:[#allocation6 + $0x2c0] sm:$0xff]
    %v137 = vld [vmem:[#allocation6 + $0x2c8] sm:$0xff]
    %v138 = vld [vmem:[#allocation6 + $0x2d0] sm:$0xff]
    %v139 = vld [vmem:[#allocation6 + $0x2d8] sm:$0xff]
    %v140 = vld [vmem:[#allocation6 + $0x2e0] sm:$0xff]
    %v141 = vld [vmem:[#allocation6 + $0x2e8] sm:$0xff]
    %v142 = vld [vmem:[#allocation6 + $0x2f0] sm:$0xff]
    %v143 = vld [vmem:[#allocation6 + $0x2f8] sm:$0xff]
    %v144 = vld [vmem:[#allocation6 + $0x300] sm:$0xff]
    %v145 = vld [vmem:[#allocation6 + $0x308] sm:$0xff]
    %v146 = vld [vmem:[#allocation6 + $0x310] sm:$0xff]
    %v147 = vld [vmem:[#allocation6 + $0x318] sm:$0xff]
    %v148 = vld [vmem:[#allocation6 + $0x320] sm:$0xff]
    %v149 = vld [vmem:[#allocation6 + $0x328] sm:$0xff]
    %v150 = vld [vmem:[#allocation6 + $0x330] sm:$0xff]
    %v151 = vld [vmem:[#allocation6 + $0x338] sm:$0xff]
    %v152 = vld [vmem:[#allocation6 + $0x340] sm:$0xff]
    %v153 = vld [vmem:[#allocation6 + $0x348] sm:$0xff]
    %v154 = vld [vmem:[#allocation6 + $0x350] sm:$0xff]
    %v155 = vld [vmem:[#allocation6 + $0x358] sm:$0xff]
    %v156 = vld [vmem:[#allocation6 + $0x360] sm:$0xff]
    %v157 = vld [vmem:[#allocation6 + $0x368] sm:$0xff]
    %v158 = vld [vmem:[#allocation6 + $0x370] sm:$0xff]
    %v159 = vld [vmem:[#allocation6 + $0x378] sm:$0xff]
    %v160 = vld [vmem:[#allocation6 + $0x380] sm:$0xff]
    %v161 = vld [vmem:[#allocation6 + $0x388] sm:$0xff]
    %v162 = vld [vmem:[#allocation6 + $0x390] sm:$0xff]
    %v163 = vld [vmem:[#allocation6 + $0x398] sm:$0xff]
    %v164 = vld [vmem:[#allocation6 + $0x3a0] sm:$0xff]
    %v165 = vld [vmem:[#allocation6 + $0x3a8] sm:$0xff]
    %v166 = vld [vmem:[#allocation6 + $0x3b0] sm:$0xff]
    %v167 = vld [vmem:[#allocation6 + $0x3b8] sm:$0xff]
    %v168 = vld [vmem:[#allocation6 + $0x3c0] sm:$0xff]
    %v169 = vld [vmem:[#allocation6 + $0x3c8] sm:$0xff]
    %v170 = vld [vmem:[#allocation6 + $0x3d0] sm:$0xff]
    %v171 = vld [vmem:[#allocation6 + $0x3d8] sm:$0xff]
    %v172 = vld [vmem:[#allocation6 + $0x3e0] sm:$0xff]
    %v173 = vld [vmem:[#allocation6 + $0x3e8] sm:$0xff]
    %v174 = vld [vmem:[#allocation6 + $0x3f0] sm:$0xff]
    %v175 = vld [vmem:[#allocation6 + $0x3f8] sm:$0xff]
    %v176 = vld [vmem:[#allocation6 + $0x400] sm:$0xff]
    %v177 = vld [vmem:[#allocation6 + $0x408] sm:$0xff]
    %v178 = vld [vmem:[#allocation6 + $0x410] sm:$0xff]
    %v179 = vld [vmem:[#allocation6 + $0x418] sm:$0xff]
    %v180 = vld [vmem:[#allocation6 + $0x420] sm:$0xff]
    %v181 = vld [vmem:[#allocation6 + $0x428] sm:$0xff]
    %v182 = vld [vmem:[#allocation6 + $0x430] sm:$0xff]
    %v183 = vld [vmem:[#allocation6 + $0x438] sm:$0xff]
    %v184 = vld [vmem:[#allocation6 + $0x440] sm:$0xff]
    %v185 = vld [vmem:[#allocation6 + $0x448] sm:$0xff]
    %v186 = vld [vmem:[#allocation6 + $0x450] sm:$0xff]
    %v187 = vld [vmem:[#allocation6 + $0x458] sm:$0xff]
    %v188 = vld [vmem:[#allocation6 + $0x460] sm:$0xff]
    %v189 = vld [vmem:[#allocation6 + $0x468] sm:$0xff]
    %v190 = vld [vmem:[#allocation6 + $0x470] sm:$0xff]
    %v191 = vld [vmem:[#allocation6 + $0x478] sm:$0xff]
    %v192 = vld [vmem:[#allocation6 + $0x480] sm:$0xff]
    %v193 = vld [vmem:[#allocation6 + $0x488] sm:$0xff]
    %v194 = vld [vmem:[#allocation6 + $0x490] sm:$0xff]
    %v195 = vld [vmem:[#allocation6 + $0x498] sm:$0xff]
    %v196 = vld [vmem:[#allocation6 + $0x4a0] sm:$0xff]
    %v197 = vld [vmem:[#allocation6 + $0x4a8] sm:$0xff]
    %v198 = vld [vmem:[#allocation6 + $0x4b0] sm:$0xff]
    %v199 = vld [vmem:[#allocation6 + $0x4b8] sm:$0xff]
    %v200 = vld [vmem:[#allocation6 + $0x4c0] sm:$0xff]
    %v201 = vld [vmem:[#allocation6 + $0x4c8] sm:$0xff]
    %v202 = vld [vmem:[#allocation6 + $0x4d0] sm:$0xff]
    %v203 = vld [vmem:[#allocation6 + $0x4d8] sm:$0xff]
    %v204 = vld [vmem:[#allocation6 + $0x4e0] sm:$0xff]
    %v205 = vld [vmem:[#allocation6 + $0x4e8] sm:$0xff]
    %v206 = vld [vmem:[#allocation6 + $0x4f0] sm:$0xff]
    %v207 = vld [vmem:[#allocation6 + $0x4f8] sm:$0xff]
    %v208 = vld [vmem:[#allocation6 + $0x500] sm:$0xff]
    %v209 = vld [vmem:[#allocation6 + $0x508] sm:$0xff]
    %v210 = vld [vmem:[#allocation6 + $0x510] sm:$0xff]
    %v211 = vld [vmem:[#allocation6 + $0x518] sm:$0xff]
    %v212 = vld [vmem:[#allocation6 + $0x520] sm:$0xff]
    %v213 = vld [vmem:[#allocation6 + $0x528] sm:$0xff]
    %v214 = vld [vmem:[#allocation6 + $0x530] sm:$0xff]
    %v215 = vld [vmem:[#allocation6 + $0x538] sm:$0xff]
    %v216 = vld [vmem:[#allocation6 + $0x540] sm:$0xff]
    %v217 = vld [vmem:[#allocation6 + $0x548] sm:$0xff]
    %v218 = vld [vmem:[#allocation6 + $0x550] sm:$0xff]
    %v219 = vld [vmem:[#allocation6 + $0x558] sm:$0xff]
    %v220 = vld [vmem:[#allocation6 + $0x560] sm:$0xff]
    %v221 = vld [vmem:[#allocation6 + $0x568] sm:$0xff]
    %v222 = vld [vmem:[#allocation6 + $0x570] sm:$0xff]
    %v223 = vld [vmem:[#allocation6 + $0x578] sm:$0xff]
    %v224 = vld [vmem:[#allocation6 + $0x580] sm:$0xff]
    %v225 = vld [vmem:[#allocation6 + $0x588] sm:$0xff]
    %v226 = vld [vmem:[#allocation6 + $0x590] sm:$0xff]
    %v227 = vld [vmem:[#allocation6 + $0x598] sm:$0xff]
    %v228 = vld [vmem:[#allocation6 + $0x5a0] sm:$0xff]
    %v229 = vld [vmem:[#allocation6 + $0x5a8] sm:$0xff]
    %v230 = vld [vmem:[#allocation6 + $0x5b0] sm:$0xff]
    %v231 = vld [vmem:[#allocation6 + $0x5b8] sm:$0xff]
    %v232 = vld [vmem:[#allocation6 + $0x5c0] sm:$0xff]
    %v233 = vld [vmem:[#allocation6 + $0x5c8] sm:$0xff]
    %v234 = vld [vmem:[#allocation6 + $0x5d0] sm:$0xff]
    %v235 = vld [vmem:[#allocation6 + $0x5d8] sm:$0xff]
    %v236 = vld [vmem:[#allocation6 + $0x5e0] sm:$0xff]
    %v237 = vld [vmem:[#allocation6 + $0x5e8] sm:$0xff]
    %v238 = vld [vmem:[#allocation6 + $0x5f0] sm:$0xff]
    %v239 = vld [vmem:[#allocation6 + $0x5f8] sm:$0xff]
    %v242 = vcombine.high %v46, %v46
    %v244 = vunpack.c.l.s4 1983009808
    %v245 = vunpack.c.0.s8 %v244
    %v246 = vlaneseq
    %v247 = vshrl.u32 %v246, 7
    %v248 = vsub.s32 %v245, %v247
    %v249 = vrot.slane %v46, %v248
    %v251 = vunpack.c.l.s4 1983009808
    %v252 = vunpack.c.0.s8 %v251
    %v253 = vlaneseq
    %v254 = vshrl.u32 %v253, 7
    %v255 = vsub.s32 %v252, %v254
    %v256 = vrot.slane %v242, %v255
    %v257 = vcombine.high %v249, %v249
    %v258 = vcombine.high %v256, %v256
    %v260 = vunpack.c.l.s4 1983009808
    %v261 = vunpack.c.0.s8 %v260
    %v262 = vlaneseq
    %v263 = vshrl.u32 %v262, 7
    %v264 = vsub.s32 %v261, %v263
    %v265 = vrot.slane %v47, %v264
    %v266 = vcombine.high %v265, %v265
    %v465 = vunpack.c.l.b16 %v48
    %v466 = vunpack.c.h.b16 %v48
    %v467 = vunpack.c.l.b16 %v49
    %v468 = vunpack.c.h.b16 %v49
    %v469 = vunpack.c.l.b16 %v50
    %v470 = vunpack.c.h.b16 %v50
    %v471 = vunpack.c.l.b16 %v51
    %v472 = vunpack.c.h.b16 %v51
    %v473 = vunpack.c.l.b16 %v52
    %v474 = vunpack.c.h.b16 %v52
    %v475 = vunpack.c.l.b16 %v53
    %v476 = vunpack.c.h.b16 %v53
    %v477 = vunpack.c.l.b16 %v54
    %v478 = vunpack.c.h.b16 %v54
    %v479 = vunpack.c.l.b16 %v55
    %v480 = vunpack.c.h.b16 %v55
    %v481 = vunpack.c.l.b16 %v56
    %v482 = vunpack.c.h.b16 %v56
    %v483 = vunpack.c.l.b16 %v57
    %v484 = vunpack.c.h.b16 %v57
    %v485 = vunpack.c.l.b16 %v58
    %v486 = vunpack.c.h.b16 %v58
    %v487 = vunpack.c.l.b16 %v59
    %v488 = vunpack.c.h.b16 %v59
    %v489 = vunpack.c.l.b16 %v60
    %v490 = vunpack.c.h.b16 %v60
    %v491 = vunpack.c.l.b16 %v61
    %v492 = vunpack.c.h.b16 %v61
    %v493 = vunpack.c.l.b16 %v62
    %v494 = vunpack.c.h.b16 %v62
    %v495 = vunpack.c.l.b16 %v63
    %v496 = vunpack.c.h.b16 %v63
    %v497 = vunpack.c.l.b16 %v64
    %v498 = vunpack.c.h.b16 %v64
    %v499 = vunpack.c.l.b16 %v65
    %v500 = vunpack.c.h.b16 %v65
    %v501 = vunpack.c.l.b16 %v66
    %v502 = vunpack.c.h.b16 %v66
    %v503 = vunpack.c.l.b16 %v67
    %v504 = vunpack.c.h.b16 %v67
    %v505 = vunpack.c.l.b16 %v68
    %v506 = vunpack.c.h.b16 %v68
    %v507 = vunpack.c.l.b16 %v69
    %v508 = vunpack.c.h.b16 %v69
    %v509 = vunpack.c.l.b16 %v70
    %v510 = vunpack.c.h.b16 %v70
    %v511 = vunpack.c.l.b16 %v71
    %v512 = vunpack.c.h.b16 %v71
    %v513 = vunpack.c.l.b16 %v72
    %v514 = vunpack.c.h.b16 %v72
    %v515 = vunpack.c.l.b16 %v73
    %v516 = vunpack.c.h.b16 %v73
    %v517 = vunpack.c.l.b16 %v74
    %v518 = vunpack.c.h.b16 %v74
    %v519 = vunpack.c.l.b16 %v75
    %v520 = vunpack.c.h.b16 %v75
    %v521 = vunpack.c.l.b16 %v76
    %v522 = vunpack.c.h.b16 %v76
    %v523 = vunpack.c.l.b16 %v77
    %v524 = vunpack.c.h.b16 %v77
    %v525 = vunpack.c.l.b16 %v78
    %v526 = vunpack.c.h.b16 %v78
    %v527 = vunpack.c.l.b16 %v79
    %v528 = vunpack.c.h.b16 %v79
    %v529 = vunpack.c.l.b16 %v80
    %v530 = vunpack.c.h.b16 %v80
    %v531 = vunpack.c.l.b16 %v81
    %v532 = vunpack.c.h.b16 %v81
    %v533 = vunpack.c.l.b16 %v82
    %v534 = vunpack.c.h.b16 %v82
    %v535 = vunpack.c.l.b16 %v83
    %v536 = vunpack.c.h.b16 %v83
    %v537 = vunpack.c.l.b16 %v84
    %v538 = vunpack.c.h.b16 %v84
    %v539 = vunpack.c.l.b16 %v85
    %v540 = vunpack.c.h.b16 %v85
    %v541 = vunpack.c.l.b16 %v86
    %v542 = vunpack.c.h.b16 %v86
    %v543 = vunpack.c.l.b16 %v87
    %v544 = vunpack.c.h.b16 %v87
    %v545 = vunpack.c.l.b16 %v88
    %v546 = vunpack.c.h.b16 %v88
    %v547 = vunpack.c.l.b16 %v89
    %v548 = vunpack.c.h.b16 %v89
    %v549 = vunpack.c.l.b16 %v90
    %v550 = vunpack.c.h.b16 %v90
    %v551 = vunpack.c.l.b16 %v91
    %v552 = vunpack.c.h.b16 %v91
    %v553 = vunpack.c.l.b16 %v92
    %v554 = vunpack.c.h.b16 %v92
    %v555 = vunpack.c.l.b16 %v93
    %v556 = vunpack.c.h.b16 %v93
    %v557 = vunpack.c.l.b16 %v94
    %v558 = vunpack.c.h.b16 %v94
    %v559 = vunpack.c.l.b16 %v95
    %v560 = vunpack.c.h.b16 %v95
    %v561 = vunpack.c.l.b16 %v96
    %v562 = vunpack.c.h.b16 %v96
    %v563 = vunpack.c.l.b16 %v97
    %v564 = vunpack.c.h.b16 %v97
    %v565 = vunpack.c.l.b16 %v98
    %v566 = vunpack.c.h.b16 %v98
    %v567 = vunpack.c.l.b16 %v99
    %v568 = vunpack.c.h.b16 %v99
    %v569 = vunpack.c.l.b16 %v100
    %v570 = vunpack.c.h.b16 %v100
    %v571 = vunpack.c.l.b16 %v101
    %v572 = vunpack.c.h.b16 %v101
    %v573 = vunpack.c.l.b16 %v102
    %v574 = vunpack.c.h.b16 %v102
    %v575 = vunpack.c.l.b16 %v103
    %v576 = vunpack.c.h.b16 %v103
    %v577 = vunpack.c.l.b16 %v104
    %v578 = vunpack.c.h.b16 %v104
    %v579 = vunpack.c.l.b16 %v105
    %v580 = vunpack.c.h.b16 %v105
    %v581 = vunpack.c.l.b16 %v106
    %v582 = vunpack.c.h.b16 %v106
    %v583 = vunpack.c.l.b16 %v107
    %v584 = vunpack.c.h.b16 %v107
    %v585 = vunpack.c.l.b16 %v108
    %v586 = vunpack.c.h.b16 %v108
    %v587 = vunpack.c.l.b16 %v109
    %v588 = vunpack.c.h.b16 %v109
    %v589 = vunpack.c.l.b16 %v110
    %v590 = vunpack.c.h.b16 %v110
    %v591 = vunpack.c.l.b16 %v111
    %v592 = vunpack.c.h.b16 %v111
    %v593 = vunpack.c.l.b16 %v112
    %v594 = vunpack.c.h.b16 %v112
    %v595 = vunpack.c.l.b16 %v113
    %v596 = vunpack.c.h.b16 %v113
    %v597 = vunpack.c.l.b16 %v114
    %v598 = vunpack.c.h.b16 %v114
    %v599 = vunpack.c.l.b16 %v115
    %v600 = vunpack.c.h.b16 %v115
    %v601 = vunpack.c.l.b16 %v116
    %v602 = vunpack.c.h.b16 %v116
    %v603 = vunpack.c.l.b16 %v117
    %v604 = vunpack.c.h.b16 %v117
    %v605 = vunpack.c.l.b16 %v118
    %v606 = vunpack.c.h.b16 %v118
    %v607 = vunpack.c.l.b16 %v119
    %v608 = vunpack.c.h.b16 %v119
    %v609 = vunpack.c.l.b16 %v120
    %v610 = vunpack.c.h.b16 %v120
    %v611 = vunpack.c.l.b16 %v121
    %v612 = vunpack.c.h.b16 %v121
    %v613 = vunpack.c.l.b16 %v122
    %v614 = vunpack.c.h.b16 %v122
    %v615 = vunpack.c.l.b16 %v123
    %v616 = vunpack.c.h.b16 %v123
    %v617 = vunpack.c.l.b16 %v124
    %v618 = vunpack.c.h.b16 %v124
    %v619 = vunpack.c.l.b16 %v125
    %v620 = vunpack.c.h.b16 %v125
    %v621 = vunpack.c.l.b16 %v126
    %v622 = vunpack.c.h.b16 %v126
    %v623 = vunpack.c.l.b16 %v127
    %v624 = vunpack.c.h.b16 %v127
    %v625 = vunpack.c.l.b16 %v128
    %v626 = vunpack.c.h.b16 %v128
    %v627 = vunpack.c.l.b16 %v129
    %v628 = vunpack.c.h.b16 %v129
    %v629 = vunpack.c.l.b16 %v130
    %v630 = vunpack.c.h.b16 %v130
    %v631 = vunpack.c.l.b16 %v131
    %v632 = vunpack.c.h.b16 %v131
    %v633 = vunpack.c.l.b16 %v132
    %v634 = vunpack.c.h.b16 %v132
    %v635 = vunpack.c.l.b16 %v133
    %v636 = vunpack.c.h.b16 %v133
    %v637 = vunpack.c.l.b16 %v134
    %v638 = vunpack.c.h.b16 %v134
    %v639 = vunpack.c.l.b16 %v135
    %v640 = vunpack.c.h.b16 %v135
    %v641 = vunpack.c.l.b16 %v136
    %v642 = vunpack.c.h.b16 %v136
    %v643 = vunpack.c.l.b16 %v137
    %v644 = vunpack.c.h.b16 %v137
    %v645 = vunpack.c.l.b16 %v138
    %v646 = vunpack.c.h.b16 %v138
    %v647 = vunpack.c.l.b16 %v139
    %v648 = vunpack.c.h.b16 %v139
    %v649 = vunpack.c.l.b16 %v140
    %v650 = vunpack.c.h.b16 %v140
    %v651 = vunpack.c.l.b16 %v141
    %v652 = vunpack.c.h.b16 %v141
    %v653 = vunpack.c.l.b16 %v142
    %v654 = vunpack.c.h.b16 %v142
    %v655 = vunpack.c.l.b16 %v143
    %v656 = vunpack.c.h.b16 %v143
    %v657 = vunpack.c.l.b16 %v144
    %v658 = vunpack.c.h.b16 %v144
    %v659 = vunpack.c.l.b16 %v145
    %v660 = vunpack.c.h.b16 %v145
    %v661 = vunpack.c.l.b16 %v146
    %v662 = vunpack.c.h.b16 %v146
    %v663 = vunpack.c.l.b16 %v147
    %v664 = vunpack.c.h.b16 %v147
    %v665 = vunpack.c.l.b16 %v148
    %v666 = vunpack.c.h.b16 %v148
    %v667 = vunpack.c.l.b16 %v149
    %v668 = vunpack.c.h.b16 %v149
    %v669 = vunpack.c.l.b16 %v150
    %v670 = vunpack.c.h.b16 %v150
    %v671 = vunpack.c.l.b16 %v151
    %v672 = vunpack.c.h.b16 %v151
    %v673 = vunpack.c.l.b16 %v152
    %v674 = vunpack.c.h.b16 %v152
    %v675 = vunpack.c.l.b16 %v153
    %v676 = vunpack.c.h.b16 %v153
    %v677 = vunpack.c.l.b16 %v154
    %v678 = vunpack.c.h.b16 %v154
    %v679 = vunpack.c.l.b16 %v155
    %v680 = vunpack.c.h.b16 %v155
    %v681 = vunpack.c.l.b16 %v156
    %v682 = vunpack.c.h.b16 %v156
    %v683 = vunpack.c.l.b16 %v157
    %v684 = vunpack.c.h.b16 %v157
    %v685 = vunpack.c.l.b16 %v158
    %v686 = vunpack.c.h.b16 %v158
    %v687 = vunpack.c.l.b16 %v159
    %v688 = vunpack.c.h.b16 %v159
    %v689 = vunpack.c.l.b16 %v160
    %v690 = vunpack.c.h.b16 %v160
    %v691 = vunpack.c.l.b16 %v161
    %v692 = vunpack.c.h.b16 %v161
    %v693 = vunpack.c.l.b16 %v162
    %v694 = vunpack.c.h.b16 %v162
    %v695 = vunpack.c.l.b16 %v163
    %v696 = vunpack.c.h.b16 %v163
    %v697 = vunpack.c.l.b16 %v164
    %v698 = vunpack.c.h.b16 %v164
    %v699 = vunpack.c.l.b16 %v165
    %v700 = vunpack.c.h.b16 %v165
    %v701 = vunpack.c.l.b16 %v166
    %v702 = vunpack.c.h.b16 %v166
    %v703 = vunpack.c.l.b16 %v167
    %v704 = vunpack.c.h.b16 %v167
    %v705 = vunpack.c.l.b16 %v168
    %v706 = vunpack.c.h.b16 %v168
    %v707 = vunpack.c.l.b16 %v169
    %v708 = vunpack.c.h.b16 %v169
    %v709 = vunpack.c.l.b16 %v170
    %v710 = vunpack.c.h.b16 %v170
    %v711 = vunpack.c.l.b16 %v171
    %v712 = vunpack.c.h.b16 %v171
    %v713 = vunpack.c.l.b16 %v172
    %v714 = vunpack.c.h.b16 %v172
    %v715 = vunpack.c.l.b16 %v173
    %v716 = vunpack.c.h.b16 %v173
    %v717 = vunpack.c.l.b16 %v174
    %v718 = vunpack.c.h.b16 %v174
    %v719 = vunpack.c.l.b16 %v175
    %v720 = vunpack.c.h.b16 %v175
    %v721 = vunpack.c.l.b16 %v176
    %v722 = vunpack.c.h.b16 %v176
    %v723 = vunpack.c.l.b16 %v177
    %v724 = vunpack.c.h.b16 %v177
    %v725 = vunpack.c.l.b16 %v178
    %v726 = vunpack.c.h.b16 %v178
    %v727 = vunpack.c.l.b16 %v179
    %v728 = vunpack.c.h.b16 %v179
    %v729 = vunpack.c.l.b16 %v180
    %v730 = vunpack.c.h.b16 %v180
    %v731 = vunpack.c.l.b16 %v181
    %v732 = vunpack.c.h.b16 %v181
    %v733 = vunpack.c.l.b16 %v182
    %v734 = vunpack.c.h.b16 %v182
    %v735 = vunpack.c.l.b16 %v183
    %v736 = vunpack.c.h.b16 %v183
    %v737 = vunpack.c.l.b16 %v184
    %v738 = vunpack.c.h.b16 %v184
    %v739 = vunpack.c.l.b16 %v185
    %v740 = vunpack.c.h.b16 %v185
    %v741 = vunpack.c.l.b16 %v186
    %v742 = vunpack.c.h.b16 %v186
    %v743 = vunpack.c.l.b16 %v187
    %v744 = vunpack.c.h.b16 %v187
    %v745 = vunpack.c.l.b16 %v188
    %v746 = vunpack.c.h.b16 %v188
    %v747 = vunpack.c.l.b16 %v189
    %v748 = vunpack.c.h.b16 %v189
    %v749 = vunpack.c.l.b16 %v190
    %v750 = vunpack.c.h.b16 %v190
    %v751 = vunpack.c.l.b16 %v191
    %v752 = vunpack.c.h.b16 %v191
    %v753 = vunpack.c.l.b16 %v192
    %v754 = vunpack.c.h.b16 %v192
    %v755 = vunpack.c.l.b16 %v193
    %v756 = vunpack.c.h.b16 %v193
    %v757 = vunpack.c.l.b16 %v194
    %v758 = vunpack.c.h.b16 %v194
    %v759 = vunpack.c.l.b16 %v195
    %v760 = vunpack.c.h.b16 %v195
    %v761 = vunpack.c.l.b16 %v196
    %v762 = vunpack.c.h.b16 %v196
    %v763 = vunpack.c.l.b16 %v197
    %v764 = vunpack.c.h.b16 %v197
    %v765 = vunpack.c.l.b16 %v198
    %v766 = vunpack.c.h.b16 %v198
    %v767 = vunpack.c.l.b16 %v199
    %v768 = vunpack.c.h.b16 %v199
    %v769 = vunpack.c.l.b16 %v200
    %v770 = vunpack.c.h.b16 %v200
    %v771 = vunpack.c.l.b16 %v201
    %v772 = vunpack.c.h.b16 %v201
    %v773 = vunpack.c.l.b16 %v202
    %v774 = vunpack.c.h.b16 %v202
    %v775 = vunpack.c.l.b16 %v203
    %v776 = vunpack.c.h.b16 %v203
    %v777 = vunpack.c.l.b16 %v204
    %v778 = vunpack.c.h.b16 %v204
    %v779 = vunpack.c.l.b16 %v205
    %v780 = vunpack.c.h.b16 %v205
    %v781 = vunpack.c.l.b16 %v206
    %v782 = vunpack.c.h.b16 %v206
    %v783 = vunpack.c.l.b16 %v207
    %v784 = vunpack.c.h.b16 %v207
    %v785 = vunpack.c.l.b16 %v208
    %v786 = vunpack.c.h.b16 %v208
    %v787 = vunpack.c.l.b16 %v209
    %v788 = vunpack.c.h.b16 %v209
    %v789 = vunpack.c.l.b16 %v210
    %v790 = vunpack.c.h.b16 %v210
    %v791 = vunpack.c.l.b16 %v211
    %v792 = vunpack.c.h.b16 %v211
    %v793 = vunpack.c.l.b16 %v212
    %v794 = vunpack.c.h.b16 %v212
    %v795 = vunpack.c.l.b16 %v213
    %v796 = vunpack.c.h.b16 %v213
    %v797 = vunpack.c.l.b16 %v214
    %v798 = vunpack.c.h.b16 %v214
    %v799 = vunpack.c.l.b16 %v215
    %v800 = vunpack.c.h.b16 %v215
    %v801 = vunpack.c.l.b16 %v216
    %v802 = vunpack.c.h.b16 %v216
    %v803 = vunpack.c.l.b16 %v217
    %v804 = vunpack.c.h.b16 %v217
    %v805 = vunpack.c.l.b16 %v218
    %v806 = vunpack.c.h.b16 %v218
    %v807 = vunpack.c.l.b16 %v219
    %v808 = vunpack.c.h.b16 %v219
    %v809 = vunpack.c.l.b16 %v220
    %v810 = vunpack.c.h.b16 %v220
    %v811 = vunpack.c.l.b16 %v221
    %v812 = vunpack.c.h.b16 %v221
    %v813 = vunpack.c.l.b16 %v222
    %v814 = vunpack.c.h.b16 %v222
    %v815 = vunpack.c.l.b16 %v223
    %v816 = vunpack.c.h.b16 %v223
    %v817 = vunpack.c.l.b16 %v224
    %v818 = vunpack.c.h.b16 %v224
    %v819 = vunpack.c.l.b16 %v225
    %v820 = vunpack.c.h.b16 %v225
    %v821 = vunpack.c.l.b16 %v226
    %v822 = vunpack.c.h.b16 %v226
    %v823 = vunpack.c.l.b16 %v227
    %v824 = vunpack.c.h.b16 %v227
    %v825 = vunpack.c.l.b16 %v228
    %v826 = vunpack.c.h.b16 %v228
    %v827 = vunpack.c.l.b16 %v229
    %v828 = vunpack.c.h.b16 %v229
    %v829 = vunpack.c.l.b16 %v230
    %v830 = vunpack.c.h.b16 %v230
    %v831 = vunpack.c.l.b16 %v231
    %v832 = vunpack.c.h.b16 %v231
    %v833 = vunpack.c.l.b16 %v232
    %v834 = vunpack.c.h.b16 %v232
    %v835 = vunpack.c.l.b16 %v233
    %v836 = vunpack.c.h.b16 %v233
    %v837 = vunpack.c.l.b16 %v234
    %v838 = vunpack.c.h.b16 %v234
    %v839 = vunpack.c.l.b16 %v235
    %v840 = vunpack.c.h.b16 %v235
    %v841 = vunpack.c.l.b16 %v236
    %v842 = vunpack.c.h.b16 %v236
    %v843 = vunpack.c.l.b16 %v237
    %v844 = vunpack.c.h.b16 %v237
    %v845 = vunpack.c.l.b16 %v238
    %v846 = vunpack.c.h.b16 %v238
    %v847 = vunpack.c.l.b16 %v239
    %v848 = vunpack.c.h.b16 %v239
    %v849 = vpack.c.b16 %v469, %v465
    %v850 = vpack.c.b16 %v470, %v466
    %v851 = vpack.c.b16 %v471, %v467
    %v852 = vpack.c.b16 %v472, %v468
    %v853 = vpack.c.b16 %v477, %v473
    %v854 = vpack.c.b16 %v478, %v474
    %v855 = vpack.c.b16 %v479, %v475
    %v856 = vpack.c.b16 %v480, %v476
    %v857 = vpack.c.b16 %v485, %v481
    %v858 = vpack.c.b16 %v486, %v482
    %v859 = vpack.c.b16 %v487, %v483
    %v860 = vpack.c.b16 %v488, %v484
    %v861 = vpack.c.b16 %v493, %v489
    %v862 = vpack.c.b16 %v494, %v490
    %v863 = vpack.c.b16 %v495, %v491
    %v864 = vpack.c.b16 %v496, %v492
    %v865 = vpack.c.b16 %v501, %v497
    %v866 = vpack.c.b16 %v502, %v498
    %v867 = vpack.c.b16 %v503, %v499
    %v868 = vpack.c.b16 %v504, %v500
    %v869 = vpack.c.b16 %v509, %v505
    %v870 = vpack.c.b16 %v510, %v506
    %v871 = vpack.c.b16 %v511, %v507
    %v872 = vpack.c.b16 %v512, %v508
    %v873 = vpack.c.b16 %v517, %v513
    %v874 = vpack.c.b16 %v518, %v514
    %v875 = vpack.c.b16 %v519, %v515
    %v876 = vpack.c.b16 %v520, %v516
    %v877 = vpack.c.b16 %v525, %v521
    %v878 = vpack.c.b16 %v526, %v522
    %v879 = vpack.c.b16 %v527, %v523
    %v880 = vpack.c.b16 %v528, %v524
    %v881 = vpack.c.b16 %v533, %v529
    %v882 = vpack.c.b16 %v534, %v530
    %v883 = vpack.c.b16 %v535, %v531
    %v884 = vpack.c.b16 %v536, %v532
    %v885 = vpack.c.b16 %v541, %v537
    %v886 = vpack.c.b16 %v542, %v538
    %v887 = vpack.c.b16 %v543, %v539
    %v888 = vpack.c.b16 %v544, %v540
    %v889 = vpack.c.b16 %v549, %v545
    %v890 = vpack.c.b16 %v550, %v546
    %v891 = vpack.c.b16 %v551, %v547
    %v892 = vpack.c.b16 %v552, %v548
    %v893 = vpack.c.b16 %v557, %v553
    %v894 = vpack.c.b16 %v558, %v554
    %v895 = vpack.c.b16 %v559, %v555
    %v896 = vpack.c.b16 %v560, %v556
    %v897 = vpack.c.b16 %v565, %v561
    %v898 = vpack.c.b16 %v566, %v562
    %v899 = vpack.c.b16 %v567, %v563
    %v900 = vpack.c.b16 %v568, %v564
    %v901 = vpack.c.b16 %v573, %v569
    %v902 = vpack.c.b16 %v574, %v570
    %v903 = vpack.c.b16 %v575, %v571
    %v904 = vpack.c.b16 %v576, %v572
    %v905 = vpack.c.b16 %v581, %v577
    %v906 = vpack.c.b16 %v582, %v578
    %v907 = vpack.c.b16 %v583, %v579
    %v908 = vpack.c.b16 %v584, %v580
    %v909 = vpack.c.b16 %v589, %v585
    %v910 = vpack.c.b16 %v590, %v586
    %v911 = vpack.c.b16 %v591, %v587
    %v912 = vpack.c.b16 %v592, %v588
    %v913 = vpack.c.b16 %v597, %v593
    %v914 = vpack.c.b16 %v598, %v594
    %v915 = vpack.c.b16 %v599, %v595
    %v916 = vpack.c.b16 %v600, %v596
    %v917 = vpack.c.b16 %v605, %v601
    %v918 = vpack.c.b16 %v606, %v602
    %v919 = vpack.c.b16 %v607, %v603
    %v920 = vpack.c.b16 %v608, %v604
    %v921 = vpack.c.b16 %v613, %v609
    %v922 = vpack.c.b16 %v614, %v610
    %v923 = vpack.c.b16 %v615, %v611
    %v924 = vpack.c.b16 %v616, %v612
    %v925 = vpack.c.b16 %v621, %v617
    %v926 = vpack.c.b16 %v622, %v618
    %v927 = vpack.c.b16 %v623, %v619
    %v928 = vpack.c.b16 %v624, %v620
    %v929 = vpack.c.b16 %v629, %v625
    %v930 = vpack.c.b16 %v630, %v626
    %v931 = vpack.c.b16 %v631, %v627
    %v932 = vpack.c.b16 %v632, %v628
    %v933 = vpack.c.b16 %v637, %v633
    %v934 = vpack.c.b16 %v638, %v634
    %v935 = vpack.c.b16 %v639, %v635
    %v936 = vpack.c.b16 %v640, %v636
    %v937 = vpack.c.b16 %v645, %v641
    %v938 = vpack.c.b16 %v646, %v642
    %v939 = vpack.c.b16 %v647, %v643
    %v940 = vpack.c.b16 %v648, %v644
    %v941 = vpack.c.b16 %v653, %v649
    %v942 = vpack.c.b16 %v654, %v650
    %v943 = vpack.c.b16 %v655, %v651
    %v944 = vpack.c.b16 %v656, %v652
    %v945 = vpack.c.b16 %v661, %v657
    %v946 = vpack.c.b16 %v662, %v658
    %v947 = vpack.c.b16 %v663, %v659
    %v948 = vpack.c.b16 %v664, %v660
    %v949 = vpack.c.b16 %v669, %v665
    %v950 = vpack.c.b16 %v670, %v666
    %v951 = vpack.c.b16 %v671, %v667
    %v952 = vpack.c.b16 %v672, %v668
    %v953 = vpack.c.b16 %v677, %v673
    %v954 = vpack.c.b16 %v678, %v674
    %v955 = vpack.c.b16 %v679, %v675
    %v956 = vpack.c.b16 %v680, %v676
    %v957 = vpack.c.b16 %v685, %v681
    %v958 = vpack.c.b16 %v686, %v682
    %v959 = vpack.c.b16 %v687, %v683
    %v960 = vpack.c.b16 %v688, %v684
    %v961 = vpack.c.b16 %v693, %v689
    %v962 = vpack.c.b16 %v694, %v690
    %v963 = vpack.c.b16 %v695, %v691
    %v964 = vpack.c.b16 %v696, %v692
    %v965 = vpack.c.b16 %v701, %v697
    %v966 = vpack.c.b16 %v702, %v698
    %v967 = vpack.c.b16 %v703, %v699
    %v968 = vpack.c.b16 %v704, %v700
    %v969 = vpack.c.b16 %v709, %v705
    %v970 = vpack.c.b16 %v710, %v706
    %v971 = vpack.c.b16 %v711, %v707
    %v972 = vpack.c.b16 %v712, %v708
    %v973 = vpack.c.b16 %v717, %v713
    %v974 = vpack.c.b16 %v718, %v714
    %v975 = vpack.c.b16 %v719, %v715
    %v976 = vpack.c.b16 %v720, %v716
    %v977 = vpack.c.b16 %v725, %v721
    %v978 = vpack.c.b16 %v726, %v722
    %v979 = vpack.c.b16 %v727, %v723
    %v980 = vpack.c.b16 %v728, %v724
    %v981 = vpack.c.b16 %v733, %v729
    %v982 = vpack.c.b16 %v734, %v730
    %v983 = vpack.c.b16 %v735, %v731
    %v984 = vpack.c.b16 %v736, %v732
    %v985 = vpack.c.b16 %v741, %v737
    %v986 = vpack.c.b16 %v742, %v738
    %v987 = vpack.c.b16 %v743, %v739
    %v988 = vpack.c.b16 %v744, %v740
    %v989 = vpack.c.b16 %v749, %v745
    %v990 = vpack.c.b16 %v750, %v746
    %v991 = vpack.c.b16 %v751, %v747
    %v992 = vpack.c.b16 %v752, %v748
    %v993 = vpack.c.b16 %v757, %v753
    %v994 = vpack.c.b16 %v758, %v754
    %v995 = vpack.c.b16 %v759, %v755
    %v996 = vpack.c.b16 %v760, %v756
    %v997 = vpack.c.b16 %v765, %v761
    %v998 = vpack.c.b16 %v766, %v762
    %v999 = vpack.c.b16 %v767, %v763
    %v1000 = vpack.c.b16 %v768, %v764
    %v1001 = vpack.c.b16 %v773, %v769
    %v1002 = vpack.c.b16 %v774, %v770
    %v1003 = vpack.c.b16 %v775, %v771
    %v1004 = vpack.c.b16 %v776, %v772
    %v1005 = vpack.c.b16 %v781, %v777
    %v1006 = vpack.c.b16 %v782, %v778
    %v1007 = vpack.c.b16 %v783, %v779
    %v1008 = vpack.c.b16 %v784, %v780
    %v1009 = vpack.c.b16 %v789, %v785
    %v1010 = vpack.c.b16 %v790, %v786
    %v1011 = vpack.c.b16 %v791, %v787
    %v1012 = vpack.c.b16 %v792, %v788
    %v1013 = vpack.c.b16 %v797, %v793
    %v1014 = vpack.c.b16 %v798, %v794
    %v1015 = vpack.c.b16 %v799, %v795
    %v1016 = vpack.c.b16 %v800, %v796
    %v1017 = vpack.c.b16 %v805, %v801
    %v1018 = vpack.c.b16 %v806, %v802
    %v1019 = vpack.c.b16 %v807, %v803
    %v1020 = vpack.c.b16 %v808, %v804
    %v1021 = vpack.c.b16 %v813, %v809
    %v1022 = vpack.c.b16 %v814, %v810
    %v1023 = vpack.c.b16 %v815, %v811
    %v1024 = vpack.c.b16 %v816, %v812
    %v1025 = vpack.c.b16 %v821, %v817
    %v1026 = vpack.c.b16 %v822, %v818
    %v1027 = vpack.c.b16 %v823, %v819
    %v1028 = vpack.c.b16 %v824, %v820
    %v1029 = vpack.c.b16 %v829, %v825
    %v1030 = vpack.c.b16 %v830, %v826
    %v1031 = vpack.c.b16 %v831, %v827
    %v1032 = vpack.c.b16 %v832, %v828
    %v1033 = vpack.c.b16 %v837, %v833
    %v1034 = vpack.c.b16 %v838, %v834
    %v1035 = vpack.c.b16 %v839, %v835
    %v1036 = vpack.c.b16 %v840, %v836
    %v1037 = vpack.c.b16 %v845, %v841
    %v1038 = vpack.c.b16 %v846, %v842
    %v1039 = vpack.c.b16 %v847, %v843
    %v1040 = vpack.c.b16 %v848, %v844
    %1233 = vmatprep.subr.bf16.mxu0 %v878
    %1234 = vmatpush1.bf16.msra.mxu0 %v877
    %1235 = vmatprep.subr.bf16.mxu0 %v874
    %1236 = vmatpush1.bf16.msra.mxu0 %v873
    %1237 = vmatprep.subr.bf16.mxu0 %v870
    %1238 = vmatpush1.bf16.msra.mxu0 %v869
    %1239 = vmatprep.subr.bf16.mxu0 %v866
    %1240 = vmatpush1.bf16.msra.mxu0 %v865
    %1241 = vmatprep.subr.bf16.mxu0 %v862
    %1242 = vmatpush1.bf16.msra.mxu0 %v861
    %1243 = vmatprep.subr.bf16.mxu0 %v858
    %1244 = vmatpush1.bf16.msra.mxu0 %v857
    %1245 = vmatprep.subr.bf16.mxu0 %v854
    %1246 = vmatpush1.bf16.msra.mxu0 %v853
    %1247 = vmatprep.subr.bf16.mxu0 %v850
    %1248 = vmatpush1.bf16.msra.mxu0 %v849
    %1249 = vmatprep.subr.bf16.mxu0 %v910
    %1250 = vmatpush2.bf16.msra.mxu0 %v909
    %1251 = vmatprep.subr.bf16.mxu0 %v906
    %1252 = vmatpush2.bf16.msra.mxu0 %v905
    %1253 = vmatprep.subr.bf16.mxu0 %v902
    %1254 = vmatpush2.bf16.msra.mxu0 %v901
    %1255 = vmatprep.subr.bf16.mxu0 %v898
    %1256 = vmatpush2.bf16.msra.mxu0 %v897
    %1257 = vmatprep.subr.bf16.mxu0 %v894
    %1258 = vmatpush2.bf16.msra.mxu0 %v893
    %1259 = vmatprep.subr.bf16.mxu0 %v890
    %1260 = vmatpush2.bf16.msra.mxu0 %v889
    %1261 = vmatprep.subr.bf16.mxu0 %v886
    %1262 = vmatpush2.bf16.msra.mxu0 %v885
    %1263 = vmatprep.subr.bf16.mxu0 %v882
    %1264 = vmatpush2.bf16.msra.mxu0 %v881
    %1265 = vmatprep.mubr.bf16.mxu0 %v257
    %1266 = vmatmul.mubr.bf16.gmra.mxu0 %v249
    %v1267 = vpop.f32.mrf.mxu0
    %v1268 = vadd.f32 0.0, %v1267
    %v1269 = vpop.f32.mrf.mxu0
    %v1270 = vadd.f32 0.0, %v1269
    %v1271 = vpop.f32.mrf.mxu0
    %v1272 = vpop.f32.mrf.mxu0
    %1273 = vdwg.mxu0
    %1274 = vmatprep.subr.bf16.mxu0 %v942
    %1275 = vmatpush1.bf16.msra.mxu0 %v941
    %1276 = vmatprep.subr.bf16.mxu0 %v938
    %1277 = vmatpush1.bf16.msra.mxu0 %v937
    %1278 = vmatprep.subr.bf16.mxu0 %v934
    %1279 = vmatpush1.bf16.msra.mxu0 %v933
    %1280 = vmatprep.subr.bf16.mxu0 %v930
    %1281 = vmatpush1.bf16.msra.mxu0 %v929
    %1282 = vmatprep.subr.bf16.mxu0 %v926
    %1283 = vmatpush1.bf16.msra.mxu0 %v925
    %1284 = vmatprep.subr.bf16.mxu0 %v922
    %1285 = vmatpush1.bf16.msra.mxu0 %v921
    %1286 = vmatprep.subr.bf16.mxu0 %v918
    %1287 = vmatpush1.bf16.msra.mxu0 %v917
    %1288 = vmatprep.subr.bf16.mxu0 %v914
    %1289 = vmatpush1.bf16.msra.mxu0 %v913
    %1290 = vmatprep.subr.bf16.mxu0 %v974
    %1291 = vmatpush2.bf16.msra.mxu0 %v973
    %1292 = vmatprep.subr.bf16.mxu0 %v970
    %1293 = vmatpush2.bf16.msra.mxu0 %v969
    %1294 = vmatprep.subr.bf16.mxu0 %v966
    %1295 = vmatpush2.bf16.msra.mxu0 %v965
    %1296 = vmatprep.subr.bf16.mxu0 %v962
    %1297 = vmatpush2.bf16.msra.mxu0 %v961
    %1298 = vmatprep.subr.bf16.mxu0 %v958
    %1299 = vmatpush2.bf16.msra.mxu0 %v957
    %1300 = vmatprep.subr.bf16.mxu0 %v954
    %1301 = vmatpush2.bf16.msra.mxu0 %v953
    %1302 = vmatprep.subr.bf16.mxu0 %v950
    %1303 = vmatpush2.bf16.msra.mxu0 %v949
    %1304 = vmatprep.subr.bf16.mxu0 %v946
    %1305 = vmatpush2.bf16.msra.mxu0 %v945
    %1306 = vmatprep.mubr.bf16.mxu0 %v258
    %1307 = vmatmul.mubr.bf16.gmra.mxu0 %v256
    %v1308 = vpop.f32.mrf.mxu0
    %v1309 = vadd.f32 %v1268, %v1308
    %v1310 = vpop.f32.mrf.mxu0
    %v1311 = vadd.f32 %v1270, %v1310
    %v1312 = vpop.f32.mrf.mxu0
    %v1313 = vpop.f32.mrf.mxu0
    %1314 = vdwg.mxu0
    %1315 = vmatprep.subr.bf16.mxu0 %v1006
    %1316 = vmatpush1.bf16.msra.mxu0 %v1005
    %1317 = vmatprep.subr.bf16.mxu0 %v1002
    %1318 = vmatpush1.bf16.msra.mxu0 %v1001
    %1319 = vmatprep.subr.bf16.mxu0 %v998
    %1320 = vmatpush1.bf16.msra.mxu0 %v997
    %1321 = vmatprep.subr.bf16.mxu0 %v994
    %1322 = vmatpush1.bf16.msra.mxu0 %v993
    %1323 = vmatprep.subr.bf16.mxu0 %v990
    %1324 = vmatpush1.bf16.msra.mxu0 %v989
    %1325 = vmatprep.subr.bf16.mxu0 %v986
    %1326 = vmatpush1.bf16.msra.mxu0 %v985
    %1327 = vmatprep.subr.bf16.mxu0 %v982
    %1328 = vmatpush1.bf16.msra.mxu0 %v981
    %1329 = vmatprep.subr.bf16.mxu0 %v978
    %1330 = vmatpush1.bf16.msra.mxu0 %v977
    %1331 = vmatprep.subr.bf16.mxu0 %v1038
    %1332 = vmatpush2.bf16.msra.mxu0 %v1037
    %1333 = vmatprep.subr.bf16.mxu0 %v1034
    %1334 = vmatpush2.bf16.msra.mxu0 %v1033
    %1335 = vmatprep.subr.bf16.mxu0 %v1030
    %1336 = vmatpush2.bf16.msra.mxu0 %v1029
    %1337 = vmatprep.subr.bf16.mxu0 %v1026
    %1338 = vmatpush2.bf16.msra.mxu0 %v1025
    %1339 = vmatprep.subr.bf16.mxu0 %v1022
    %1340 = vmatpush2.bf16.msra.mxu0 %v1021
    %1341 = vmatprep.subr.bf16.mxu0 %v1018
    %1342 = vmatpush2.bf16.msra.mxu0 %v1017
    %1343 = vmatprep.subr.bf16.mxu0 %v1014
    %1344 = vmatpush2.bf16.msra.mxu0 %v1013
    %1345 = vmatprep.subr.bf16.mxu0 %v1010
    %1346 = vmatpush2.bf16.msra.mxu0 %v1009
    %1347 = vmatprep.mubr.bf16.mxu0 %v266
    %1348 = vmatmul.mubr.bf16.gmra.mxu0 %v265
    %v1349 = vpop.f32.mrf.mxu0
    %v1350 = vadd.f32 %v1309, %v1349
    %v1351 = vpop.f32.mrf.mxu0
    %v1352 = vadd.f32 %v1311, %v1351
    %v1353 = vpop.f32.mrf.mxu0
    %v1354 = vpop.f32.mrf.mxu0
    %1355 = vdwg.mxu0
    %1356 = vmatprep.subr.bf16.mxu0 %v880
    %1357 = vmatpush1.bf16.msra.mxu0 %v879
    %1358 = vmatprep.subr.bf16.mxu0 %v876
    %1359 = vmatpush1.bf16.msra.mxu0 %v875
    %1360 = vmatprep.subr.bf16.mxu0 %v872
    %1361 = vmatpush1.bf16.msra.mxu0 %v871
    %1362 = vmatprep.subr.bf16.mxu0 %v868
    %1363 = vmatpush1.bf16.msra.mxu0 %v867
    %1364 = vmatprep.subr.bf16.mxu0 %v864
    %1365 = vmatpush1.bf16.msra.mxu0 %v863
    %1366 = vmatprep.subr.bf16.mxu0 %v860
    %1367 = vmatpush1.bf16.msra.mxu0 %v859
    %1368 = vmatprep.subr.bf16.mxu0 %v856
    %1369 = vmatpush1.bf16.msra.mxu0 %v855
    %1370 = vmatprep.subr.bf16.mxu0 %v852
    %1371 = vmatpush1.bf16.msra.mxu0 %v851
    %1372 = vmatprep.subr.bf16.mxu0 %v912
    %1373 = vmatpush2.bf16.msra.mxu0 %v911
    %1374 = vmatprep.subr.bf16.mxu0 %v908
    %1375 = vmatpush2.bf16.msra.mxu0 %v907
    %1376 = vmatprep.subr.bf16.mxu0 %v904
    %1377 = vmatpush2.bf16.msra.mxu0 %v903
    %1378 = vmatprep.subr.bf16.mxu0 %v900
    %1379 = vmatpush2.bf16.msra.mxu0 %v899
    %1380 = vmatprep.subr.bf16.mxu0 %v896
    %1381 = vmatpush2.bf16.msra.mxu0 %v895
    %1382 = vmatprep.subr.bf16.mxu0 %v892
    %1383 = vmatpush2.bf16.msra.mxu0 %v891
    %1384 = vmatprep.subr.bf16.mxu0 %v888
    %1385 = vmatpush2.bf16.msra.mxu0 %v887
    %1386 = vmatprep.subr.bf16.mxu0 %v884
    %1387 = vmatpush2.bf16.msra.mxu0 %v883
    %1388 = vmatprep.mubr.bf16.mxu0 %v257
    %1389 = vmatmul.mubr.bf16.gmra.mxu0 %v249
    %v1390 = vpop.f32.mrf.mxu0
    %v1391 = vadd.f32 0.0, %v1390
    %v1392 = vpop.f32.mrf.mxu0
    %v1393 = vadd.f32 0.0, %v1392
    %v1394 = vpop.f32.mrf.mxu0
    %v1395 = vpop.f32.mrf.mxu0
    %1396 = vdwg.mxu0
    %1397 = vmatprep.subr.bf16.mxu0 %v944
    %1398 = vmatpush1.bf16.msra.mxu0 %v943
    %1399 = vmatprep.subr.bf16.mxu0 %v940
    %1400 = vmatpush1.bf16.msra.mxu0 %v939
    %1401 = vmatprep.subr.bf16.mxu0 %v936
    %1402 = vmatpush1.bf16.msra.mxu0 %v935
    %1403 = vmatprep.subr.bf16.mxu0 %v932
    %1404 = vmatpush1.bf16.msra.mxu0 %v931
    %1405 = vmatprep.subr.bf16.mxu0 %v928
    %1406 = vmatpush1.bf16.msra.mxu0 %v927
    %1407 = vmatprep.subr.bf16.mxu0 %v924
    %1408 = vmatpush1.bf16.msra.mxu0 %v923
    %1409 = vmatprep.subr.bf16.mxu0 %v920
    %1410 = vmatpush1.bf16.msra.mxu0 %v919
    %1411 = vmatprep.subr.bf16.mxu0 %v916
    %1412 = vmatpush1.bf16.msra.mxu0 %v915
    %1413 = vmatprep.subr.bf16.mxu0 %v976
    %1414 = vmatpush2.bf16.msra.mxu0 %v975
    %1415 = vmatprep.subr.bf16.mxu0 %v972
    %1416 = vmatpush2.bf16.msra.mxu0 %v971
    %1417 = vmatprep.subr.bf16.mxu0 %v968
    %1418 = vmatpush2.bf16.msra.mxu0 %v967
    %1419 = vmatprep.subr.bf16.mxu0 %v964
    %1420 = vmatpush2.bf16.msra.mxu0 %v963
    %1421 = vmatprep.subr.bf16.mxu0 %v960
    %1422 = vmatpush2.bf16.msra.mxu0 %v959
    %1423 = vmatprep.subr.bf16.mxu0 %v956
    %1424 = vmatpush2.bf16.msra.mxu0 %v955
    %1425 = vmatprep.subr.bf16.mxu0 %v952
    %1426 = vmatpush2.bf16.msra.mxu0 %v951
    %1427 = vmatprep.subr.bf16.mxu0 %v948
    %1428 = vmatpush2.bf16.msra.mxu0 %v947
    %1429 = vmatprep.mubr.bf16.mxu0 %v258
    %1430 = vmatmul.mubr.bf16.gmra.mxu0 %v256
    %v1431 = vpop.f32.mrf.mxu0
    %v1432 = vadd.f32 %v1391, %v1431
    %v1433 = vpop.f32.mrf.mxu0
    %v1434 = vadd.f32 %v1393, %v1433
    %v1435 = vpop.f32.mrf.mxu0
    %v1436 = vpop.f32.mrf.mxu0
    %1437 = vdwg.mxu0
    %1438 = vmatprep.subr.bf16.mxu0 %v1008
    %1439 = vmatpush1.bf16.msra.mxu0 %v1007
    %1440 = vmatprep.subr.bf16.mxu0 %v1004
    %1441 = vmatpush1.bf16.msra.mxu0 %v1003
    %1442 = vmatprep.subr.bf16.mxu0 %v1000
    %1443 = vmatpush1.bf16.msra.mxu0 %v999
    %1444 = vmatprep.subr.bf16.mxu0 %v996
    %1445 = vmatpush1.bf16.msra.mxu0 %v995
    %1446 = vmatprep.subr.bf16.mxu0 %v992
    %1447 = vmatpush1.bf16.msra.mxu0 %v991
    %1448 = vmatprep.subr.bf16.mxu0 %v988
    %1449 = vmatpush1.bf16.msra.mxu0 %v987
    %1450 = vmatprep.subr.bf16.mxu0 %v984
    %1451 = vmatpush1.bf16.msra.mxu0 %v983
    %1452 = vmatprep.subr.bf16.mxu0 %v980
    %1453 = vmatpush1.bf16.msra.mxu0 %v979
    %1454 = vmatprep.subr.bf16.mxu0 %v1040
    %1455 = vmatpush2.bf16.msra.mxu0 %v1039
    %1456 = vmatprep.subr.bf16.mxu0 %v1036
    %1457 = vmatpush2.bf16.msra.mxu0 %v1035
    %1458 = vmatprep.subr.bf16.mxu0 %v1032
    %1459 = vmatpush2.bf16.msra.mxu0 %v1031
    %1460 = vmatprep.subr.bf16.mxu0 %v1028
    %1461 = vmatpush2.bf16.msra.mxu0 %v1027
    %1462 = vmatprep.subr.bf16.mxu0 %v1024
    %1463 = vmatpush2.bf16.msra.mxu0 %v1023
    %1464 = vmatprep.subr.bf16.mxu0 %v1020
    %1465 = vmatpush2.bf16.msra.mxu0 %v1019
    %1466 = vmatprep.subr.bf16.mxu0 %v1016
    %1467 = vmatpush2.bf16.msra.mxu0 %v1015
    %1468 = vmatprep.subr.bf16.mxu0 %v1012
    %1469 = vmatpush2.bf16.msra.mxu0 %v1011
    %1470 = vmatprep.mubr.bf16.mxu0 %v266
    %1471 = vmatmul.mubr.bf16.gmra.mxu0 %v265
    %v1472 = vpop.f32.mrf.mxu0
    %v1473 = vadd.f32 %v1432, %v1472
    %v1474 = vpop.f32.mrf.mxu0
    %v1475 = vadd.f32 %v1434, %v1474
    %v1476 = vpop.f32.mrf.mxu0
    %v1477 = vpop.f32.mrf.mxu0
    %1478 = vdwg.mxu0
    %v1483 = vcombine.low %v1350, %v1352
    %v1484 = vcombine.low %v1473, %v1475
    %v1487 = vadd.f32 %v44, %v1483
    %v1488 = vadd.f32 %v45, %v1484
    %1489 = vst [vmem:[#allocation2] sm:$0xff] %v1487
    %1490 = vst [vmem:[#allocation2 + $0x8] sm:$0xff] %v1488
    // Predicated region
    $region22: #{tpu_custom_call.1} parent=1 // pred_check
      %p1491 = pneg %p38
    $region23: #{tpu_custom_call.1} parent=1 // pred_check_branch
      %1493 = sbr.rel (%p1491) target = $region25
    $region24: #{tpu_custom_call.1} parent=1 // pred_region
      %v1494 = vld [vmem:[#allocation2] sm:$0xff]
      %v1495 = vld [vmem:[#allocation2 + $0x8] sm:$0xff]
      %v1498 = vcombine.high %v1494, %v1494
      %v1499 = vcombine.high %v1495, %v1495
      %vm1502 = vcmask 1043456
      %v1503 = vsel %vm1502, %v1494, 0.0
      %v1504 = vsel %vm1502, %v1498, 0.0
      %v1505 = vadd.f32 %v1503, %v1504
      %v1506 = vsel %vm1502, %v1495, 0.0
      %v1507 = vadd.f32 %v1505, %v1506
      %v1508 = vsel %vm1502, %v1499, 0.0
      %v1509 = vadd.f32 %v1507, %v1508
      %1510 = vadd.xlane.f32.xlu0 %v1509
      %v1511 = vpop.xlane.xlu0 %1510
      %v1512 = vrcp.pop 512.0
      %v1513 = vmul.f32 %v1511, %v1512
      %v1516 = vunpack.c.l.s4 839922192
      %v1517 = vunpack.c.0.s8 %v1516
      %v1518 = vlaneseq
      %v1519 = vshrl.u32 %v1518, 7
      %v1520 = vsub.s32 %v1517, %v1519
      %v1521 = vrot.slane %v1513, %v1520
      %v1523 = vsub.f32 %v1494, %v1521
      %v1524 = vsub.f32 %v1495, %v1521
      %v1525 = vmul.f32 %v1523, %v1523
      %v1526 = vmul.f32 %v1524, %v1524
      %v1529 = vcombine.high %v1525, %v1525
      %v1530 = vcombine.high %v1526, %v1526
      %v1533 = vsel %vm1502, %v1525, 0.0
      %v1534 = vsel %vm1502, %v1529, 0.0
      %v1535 = vadd.f32 %v1533, %v1534
      %v1536 = vsel %vm1502, %v1526, 0.0
      %v1537 = vadd.f32 %v1535, %v1536
      %v1538 = vsel %vm1502, %v1530, 0.0
      %v1539 = vadd.f32 %v1537, %v1538
      %1540 = vadd.xlane.f32.xlu0 %v1539
      %v1541 = vpop.xlane.xlu0 %1540
      %v1542 = vrcp.pop 511.0
      %v1543 = vmul.f32 %v1541, %v1542
      %v1544 = vrsqrt.pop %v1543
      %v1545 = vmul.f32 %v1543, %v1544
      %vm1546 = vcmp.eq.f32.partialorder %v1543, inf
      %v1547 = vsel %vm1546, %v1543, %v1545
      %vm1548 = vcmp.eq.f32.partialorder %v1543, 0.0
      %v1549 = vand.u32 %v1543, 2147483648
      %v1550 = vsel %vm1548, %v1549, %v1547
      %v1551 = vadd.f32 %v1550, 1e-07
      %v1554 = vunpack.c.l.s4 839922192
      %v1555 = vunpack.c.0.s8 %v1554
      %v1556 = vlaneseq
      %v1557 = vshrl.u32 %v1556, 7
      %v1558 = vsub.s32 %v1555, %v1557
      %v1559 = vrot.slane %v1551, %v1558
      %v1561 = vrcp.pop %v1559
      %v1562 = vmul.f32 %v1523, %v1561
      %v1563 = vmul.f32 %v1524, %v1561
      %v1566 = vrot.slane %v1562, 6
      %v1567 = vrot.slane %v1563, 6
      %v1570 = vsub.f32 %v1562, %v1566
      %v1571 = vsub.f32 %v1563, %v1567
      %v1572 = vmul.f32 %v1570, %v1570
      %v1573 = vmul.f32 %v1571, %v1571
      %v1576 = vcombine.high %v1572, %v1572
      %v1577 = vcombine.high %v1573, %v1573
      %v1578 = vrot.slane %v1572, 2
      %v1579 = vrot.slane %v1576, 2
      %v1580 = vrot.slane %v1573, 2
      %v1581 = vrot.slane %v1577, 2
      %vm1586 = vcmask 1041408
      %v1587 = vsel %vm1586, %v1578, 0.0
      %v1588 = vsel %vm1586, %v1579, 0.0
      %v1589 = vadd.f32 %v1587, %v1588
      %v1590 = vsel %vm1586, %v1580, 0.0
      %v1591 = vadd.f32 %v1589, %v1590
      %v1592 = vsel %vm1586, %v1581, 0.0
      %v1593 = vadd.f32 %v1591, %v1592
      %1594 = vadd.xlane.f32.xlu0 %v1593
      %v1595 = vpop.xlane.xlu0 %1594
      %v1596 = vrot.slane %v1595, 4
      %v1597 = vadd.f32 %v1595, %v1596
      %v1598 = vrot.slane %v1597, 2
      %v1599 = vadd.f32 %v1597, %v1598
      %v1600 = vrot.slane %v1599, 1
      %v1601 = vadd.f32 %v1599, %v1600
      %s1602 = vtos %v1601
      %v1603 = vrcp.pop 1024.0
      %s1604 = vtos %v1603
      %s1605 = smul.f32 %s1602, %s1604
      %v1606 = vstv %s1605
      %vm1607 = vcmask 0
      %1608 = vst.msk [vmem:[#allocation8] sm:$0x1] %vm1607, %v1606
    $region25: #{tpu_custom_call.1} parent=1 // pred_fallthru
      _
    // Predicated region
    $region26: #{tpu_custom_call.1} parent=1 // pred_check
      _
    $region27: #{tpu_custom_call.1} parent=1 // pred_check_branch
      %1610 = sbr.rel (0) target = $region29
    $region28: #{tpu_custom_call.1} parent=1 // pred_region
      %s1612 = ssub.s32 16, 16
      %1613 = vsyncadd [#allocation5], %s1612
      %s1615 = sshll.u32 [#allocation8], 4
      %s1616 = int_to_ptr.vmem [resolvable:$true] %s1615
      %1618 = dma.vmem_to_hbm [thread:$0]  %s1616, 16, %s2, [#allocation5]
    $region29: #{tpu_custom_call.1} parent=1 // pred_fallthru
      _
    // Predicated region
    $region30: #{tpu_custom_call.1} parent=1 // pred_check
      _
    $region31: #{tpu_custom_call.1} parent=1 // pred_check_branch
      %1620 = sbr.rel (0) target = $region33
    $region32: #{tpu_custom_call.1} parent=1 // pred_region
      %1621 = dma.done [#allocation5], 16
    $region33: #{tpu_custom_call.1} parent=1 // pred_fallthru
      _
    %1622 = vsyncpa [#allocation4], 1
    %1623 = vsyncpa [#allocation7], 1
    %1624 = vsyncpa [#allocation5], 1

</llo_original>
